<compile_context>
chip_gen: v5e
topology: v5e:2x2
jax: 0.10.0
libtpu: 0.0.40
codegen_flags: <defaults>
</compile_context>

<pallas_src>
import jax
import jax.numpy as jnp
from jax.experimental import pallas as pl
from jax.experimental.pallas import tpu as pltpu


def _upblock_kernel(x_ref, m_ref, b_ref, o_ref):
    """One (n, row-tile) block of ConvTranspose2d(k=2, s=2).

    x_ref : (1, C_in, THB, F*W)      folded input rows (lane index = r*W + w)
    m_ref : (C_in*F*W, C_out*L)      combined scatter + kh/kw-interleave + channel-mix matrix
    b_ref : (C_out,)         SMEM    bias
    o_ref : (1, C_out, THB, L)       L = 4*F*W output lanes per folded row group (final NCHW order)
    """
    c_in = x_ref.shape[1]
    c_out = o_ref.shape[1]
    lanes = o_ref.shape[3]

    # Fuse the per-channel slabs into one (THB, C_in*F*W) operand (lane concat) so a
    # single MXU push handles the scatter, the kh/kw interleave and the channel sum.
    x2 = jnp.concatenate([x_ref[0, ci] for ci in range(c_in)], axis=-1)
    y = jnp.dot(x2, m_ref[...], preferred_element_type=jnp.float32)

    # Per-co slices sit on L-lane boundaries (L % 128 == 0 when the fold applies),
    # so every store is a full-lane slab of contiguous output rows.
    for co in range(c_out):
        o_ref[0, co] = (y[:, co * lanes:(co + 1) * lanes] + b_ref[co]).astype(o_ref.dtype)


def _pick_fold(h, w):
    """Row-fold factor F: smallest F dividing H such that 4*F*W is a multiple of 128."""
    if (4 * w) % 128 == 0:
        return 1
    for f in range(2, 17):
        if h % f == 0 and (4 * w * f) % 128 == 0:
            return f
    return 1            # fall back to unfolded rows (block still equals the full lane dim)


def _pick_row_tile(hb_total, n, row_bytes, target_bytes=4 << 20, min_steps=4):
    """Folded row-groups per grid step.

    Candidates: multiples of 8 dividing hb_total, plus hb_total itself (always a legal
    block dim).  Prefer the largest candidate within ~target_bytes of output that still
    leaves >= min_steps grid steps (keeps both v7x TensorCores busy); otherwise the
    largest within budget; otherwise the smallest legal candidate (never silently pick
    a huge full-H tile that blows the scoped VMEM budget).
    """
    cands = [d for d in range(8, hb_total + 1, 8) if hb_total % d == 0]
    if hb_total not in cands:
        cands.append(hb_total)
    budget = max(1, target_bytes // row_bytes)
    within = [d for d in cands if d <= budget]
    preferred = [d for d in within if n * (hb_total // d) >= min_steps]
    if preferred:
        return max(preferred)
    if within:
        return max(within)
    return min(cands)


@jax.jit
def upblock_forward(x, weight, bias):
    """ConvTranspose2d(C_in, C_out, kernel_size=2, stride=2). NCHW in / NCHW out.

    x      : (N, C_in, H, W)      float32
    weight : (C_in, C_out, 2, 2)  float32  (PyTorch ConvTranspose2d layout)
    bias   : (C_out,)             float32
    returns: (N, C_out, 2H, 2W)   float32
    """
    n, c_in, h, w = x.shape
    c_out = weight.shape[1]

    f = _pick_fold(h, w)
    hb = h // f                       # folded row groups
    fw = f * w                        # input lanes per row group
    lanes = 4 * fw                    # output lanes per row group (its final NCHW bytes)

    # --- combined matrix (weight-sized * F^2; activations never see HBM layout glue) ---
    # Output lane l within a row group decodes as l = (2r + kh)*2W + 2w + kw, i.e. the
    # exact NCHW byte order of the 2F output rows produced by that group.
    l = jnp.arange(lanes)
    t = l // (2 * w)
    r_l, kh_l = t // 2, t % 2
    w_l, kw_l = (l % (2 * w)) // 2, l % 2
    m = jnp.arange(fw)
    r_m, w_m = m // w, m % w
    sel = ((r_m[:, None] == r_l[None, :]) &
           (w_m[:, None] == w_l[None, :])).astype(x.dtype)        # (F*W, L)  0/1 scatter
    wl = weight[:, :, kh_l, kw_l].astype(x.dtype)                 # (C_in, C_out, L)
    mat = (sel[None, :, None, :] * wl[:, None, :, :]).reshape(c_in * fw, c_out * lanes)

    # Folded views: (H, W) <-> (H/F, F*W) and (2H, 2W) <-> (H/F, 4FW) preserve the
    # contiguous NCHW byte order, so these wrapper reshapes are layout-only.
    x_f = x.reshape(n, c_in, hb, fw)

    thb = _pick_row_tile(hb, n, row_bytes=c_out * lanes * 4)
    grid = (n, hb // thb)

    # Explicit VMEM budget: 2x in tile + 2x out tile + Y scratch + 2x mat + margin.
    in_tile = c_in * thb * fw * 4
    out_tile = c_out * thb * lanes * 4
    est = 2 * in_tile + 3 * out_tile + 2 * mat.size * 4 + (2 << 20)
    vmem_limit = int(min(max(est, 32 << 20), 64 << 20))

    out = pl.pallas_call(
        _upblock_kernel,
        out_shape=jax.ShapeDtypeStruct((n, c_out, hb, lanes), x.dtype),
        grid=grid,
        in_specs=[
            pl.BlockSpec((1, c_in, thb, fw), lambda ni, hi: (ni, 0, hi, 0)),
            pl.BlockSpec((c_in * fw, c_out * lanes), lambda ni, hi: (0, 0)),
            pl.BlockSpec(memory_space=pltpu.MemorySpace.SMEM),
        ],
        out_specs=pl.BlockSpec((1, c_out, thb, lanes), lambda ni, hi: (ni, 0, hi, 0)),
        compiler_params=pltpu.CompilerParams(
            dimension_semantics=("parallel", "parallel"),
            vmem_limit_bytes=vmem_limit),
    )(x_f, mat, bias)

    # Pure view back to NCHW: lane order inside each row group is already the byte
    # order of the 2F corresponding output rows.
    return out.reshape(n, c_out, 2 * h, 2 * w)


def _reference_forward(x, weight, bias):
    # Direct einsum of the PyTorch ConvTranspose2d (k=2, s=2) definition.
    y = jnp.einsum("nihw,iokl->nhwklo", x, weight) + bias        # (n, h, w, kh, kw, co)
    n, h, w, _, _, c_out = y.shape
    y = jnp.transpose(y, (0, 1, 3, 2, 4, 5)).reshape(n, 2 * h, 2 * w, c_out)
    return jnp.transpose(y, (0, 3, 1, 2))                       # NCHW


if __name__ == "__main__":
    key = jax.random.PRNGKey(0)
    k_x, k_w, k_b = jax.random.split(key, 3)

    # Small shapes consistent with UpBlock(in_channels=4, out_channels=8)
    N, C_in, H, W = 2, 4, 16, 16
    C_out = 8

    x = jax.random.normal(k_x, (N, C_in, H, W), dtype=jnp.float32)
    weight = jax.random.normal(k_w, (C_in, C_out, 2, 2), dtype=jnp.float32) * 0.1
    bias = jax.random.normal(k_b, (C_out,), dtype=jnp.float32) * 0.1

    out = jax.block_until_ready(upblock_forward(x, weight, bias))

    ref = _reference_forward(x, weight, bias)
    assert out.shape == (N, C_out, 2 * H, 2 * W), out.shape
    assert jnp.allclose(out, ref, atol=1e-4, rtol=1e-4), "mismatch vs reference"

    print("KERNEL_OK")
</pallas_src>

<mosaic_0001>
module attributes {stable_mosaic.version = 11 : i64} {
  func.func @_upblock_kernel(%arg0: i32, %arg1: i32, %arg2: memref<1x4x8x32xf32, #tpu.memory_space<vmem>>, %arg3: memref<128x1024xf32, #tpu.memory_space<vmem>>, %arg4: memref<8xf32, #tpu.memory_space<smem>>, %arg5: memref<1x8x8x128xf32, #tpu.memory_space<vmem>>) attributes {dimension_semantics = [#tpu.dimension_semantics<parallel>, #tpu.dimension_semantics<parallel>], iteration_bounds = array<i64: 2, 1>, scalar_prefetch = 0 : i64, scratch_operands = 0 : i64, tpu.core_type = #tpu.core_type<tc>, window_params = [{transform_indices = @transform_0, window_bounds = array<i64: 1, 4, 8, 32>}, {pipeline_mode = #tpu.pipeline_mode<synchronous>, transform_indices = @transform_1, window_bounds = array<i64: 128, 1024>}, {transform_indices = @transform_2, window_bounds = array<i64: 8>}, {transform_indices = @transform_3, window_bounds = array<i64: 1, 8, 8, 128>}]} {
    %c0 = arith.constant 0 : index
    %c0_0 = arith.constant 0 : index
    %c0_1 = arith.constant 0 : index
    %c0_2 = arith.constant 0 : index
    %0 = vector.load %arg2[%c0, %c0_0, %c0_1, %c0_2] : memref<1x4x8x32xf32, #tpu.memory_space<vmem>>, vector<1x1x8x32xf32>
    %1 = vector.shape_cast %0 : vector<1x1x8x32xf32> to vector<8x32xf32>
    %c0_3 = arith.constant 0 : index
    %c1 = arith.constant 1 : index
    %c0_4 = arith.constant 0 : index
    %c0_5 = arith.constant 0 : index
    %2 = vector.load %arg2[%c0_3, %c1, %c0_4, %c0_5] : memref<1x4x8x32xf32, #tpu.memory_space<vmem>>, vector<1x1x8x32xf32>
    %3 = vector.shape_cast %2 : vector<1x1x8x32xf32> to vector<8x32xf32>
    %c0_6 = arith.constant 0 : index
    %c2 = arith.constant 2 : index
    %c0_7 = arith.constant 0 : index
    %c0_8 = arith.constant 0 : index
    %4 = vector.load %arg2[%c0_6, %c2, %c0_7, %c0_8] : memref<1x4x8x32xf32, #tpu.memory_space<vmem>>, vector<1x1x8x32xf32>
    %5 = vector.shape_cast %4 : vector<1x1x8x32xf32> to vector<8x32xf32>
    %c0_9 = arith.constant 0 : index
    %c3 = arith.constant 3 : index
    %c0_10 = arith.constant 0 : index
    %c0_11 = arith.constant 0 : index
    %6 = vector.load %arg2[%c0_9, %c3, %c0_10, %c0_11] : memref<1x4x8x32xf32, #tpu.memory_space<vmem>>, vector<1x1x8x32xf32>
    %7 = vector.shape_cast %6 : vector<1x1x8x32xf32> to vector<8x32xf32>
    %8 = tpu.concatenate %1, %3, %5, %7 in 1 : vector<8x32xf32>, vector<8x32xf32>, vector<8x32xf32>, vector<8x32xf32> -> vector<8x128xf32>
    %c0_12 = arith.constant 0 : index
    %c0_13 = arith.constant 0 : index
    %9 = vector.load %arg3[%c0_12, %c0_13] : memref<128x1024xf32, #tpu.memory_space<vmem>>, vector<128x1024xf32>
    %cst = arith.constant dense<0.000000e+00> : vector<8x1024xf32>
    %10 = tpu.matmul %8, %9, %cst {dimension_numbers = #tpu.dot_dimension_numbers<[1], [0], [0], [1], [0, 0, 1, 1], [], []>} : vector<8x128xf32>, vector<128x1024xf32>, vector<8x1024xf32> -> vector<8x1024xf32>
    %11 = vector.extract_strided_slice %10 {offsets = [0, 0], sizes = [8, 128], strides = [1, 1]} : vector<8x1024xf32> to vector<8x128xf32>
    %c0_14 = arith.constant 0 : index
    %12 = memref.load %arg4[%c0_14] : memref<8xf32, #tpu.memory_space<smem>>
    %13 = vector.broadcast %12 : f32 to vector<8x128xf32>
    %14 = arith.addf %11, %13 : vector<8x128xf32>
    %c0_15 = arith.constant 0 : index
    %c0_16 = arith.constant 0 : index
    %c0_17 = arith.constant 0 : index
    %c0_18 = arith.constant 0 : index
    %15 = vector.load %arg5[%c0_15, %c0_16, %c0_17, %c0_18] : memref<1x8x8x128xf32, #tpu.memory_space<vmem>>, vector<1x1x8x128xf32>
    %16 = vector.shape_cast %15 : vector<1x1x8x128xf32> to vector<8x128xf32>
    %17 = vector.shape_cast %14 : vector<8x128xf32> to vector<1x1x8x128xf32>
    tpu.vector_store %arg5[%c0_15, %c0_16, %c0_17, %c0_18], %17 {strides = array<i32>} : memref<1x8x8x128xf32, #tpu.memory_space<vmem>>, vector<1x1x8x128xf32>,
    %18 = vector.extract_strided_slice %10 {offsets = [0, 128], sizes = [8, 128], strides = [1, 1]} : vector<8x1024xf32> to vector<8x128xf32>
    %c1_19 = arith.constant 1 : index
    %19 = memref.load %arg4[%c1_19] : memref<8xf32, #tpu.memory_space<smem>>
    %20 = vector.broadcast %19 : f32 to vector<8x128xf32>
    %21 = arith.addf %18, %20 : vector<8x128xf32>
    %c0_20 = arith.constant 0 : index
    %c1_21 = arith.constant 1 : index
    %c0_22 = arith.constant 0 : index
    %c0_23 = arith.constant 0 : index
    %22 = vector.load %arg5[%c0_20, %c1_21, %c0_22, %c0_23] : memref<1x8x8x128xf32, #tpu.memory_space<vmem>>, vector<1x1x8x128xf32>
    %23 = vector.shape_cast %22 : vector<1x1x8x128xf32> to vector<8x128xf32>
    %24 = vector.shape_cast %21 : vector<8x128xf32> to vector<1x1x8x128xf32>
    tpu.vector_store %arg5[%c0_20, %c1_21, %c0_22, %c0_23], %24 {strides = array<i32>} : memref<1x8x8x128xf32, #tpu.memory_space<vmem>>, vector<1x1x8x128xf32>,
    %25 = vector.extract_strided_slice %10 {offsets = [0, 256], sizes = [8, 128], strides = [1, 1]} : vector<8x1024xf32> to vector<8x128xf32>
    %c2_24 = arith.constant 2 : index
    %26 = memref.load %arg4[%c2_24] : memref<8xf32, #tpu.memory_space<smem>>
    %27 = vector.broadcast %26 : f32 to vector<8x128xf32>
    %28 = arith.addf %25, %27 : vector<8x128xf32>
    %c0_25 = arith.constant 0 : index
    %c2_26 = arith.constant 2 : index
    %c0_27 = arith.constant 0 : index
    %c0_28 = arith.constant 0 : index
    %29 = vector.load %arg5[%c0_25, %c2_26, %c0_27, %c0_28] : memref<1x8x8x128xf32, #tpu.memory_space<vmem>>, vector<1x1x8x128xf32>
    %30 = vector.shape_cast %29 : vector<1x1x8x128xf32> to vector<8x128xf32>
    %31 = vector.shape_cast %28 : vector<8x128xf32> to vector<1x1x8x128xf32>
    tpu.vector_store %arg5[%c0_25, %c2_26, %c0_27, %c0_28], %31 {strides = array<i32>} : memref<1x8x8x128xf32, #tpu.memory_space<vmem>>, vector<1x1x8x128xf32>,
    %32 = vector.extract_strided_slice %10 {offsets = [0, 384], sizes = [8, 128], strides = [1, 1]} : vector<8x1024xf32> to vector<8x128xf32>
    %c3_29 = arith.constant 3 : index
    %33 = memref.load %arg4[%c3_29] : memref<8xf32, #tpu.memory_space<smem>>
    %34 = vector.broadcast %33 : f32 to vector<8x128xf32>
    %35 = arith.addf %32, %34 : vector<8x128xf32>
    %c0_30 = arith.constant 0 : index
    %c3_31 = arith.constant 3 : index
    %c0_32 = arith.constant 0 : index
    %c0_33 = arith.constant 0 : index
    %36 = vector.load %arg5[%c0_30, %c3_31, %c0_32, %c0_33] : memref<1x8x8x128xf32, #tpu.memory_space<vmem>>, vector<1x1x8x128xf32>
    %37 = vector.shape_cast %36 : vector<1x1x8x128xf32> to vector<8x128xf32>
    %38 = vector.shape_cast %35 : vector<8x128xf32> to vector<1x1x8x128xf32>
    tpu.vector_store %arg5[%c0_30, %c3_31, %c0_32, %c0_33], %38 {strides = array<i32>} : memref<1x8x8x128xf32, #tpu.memory_space<vmem>>, vector<1x1x8x128xf32>,
    %39 = vector.extract_strided_slice %10 {offsets = [0, 512], sizes = [8, 128], strides = [1, 1]} : vector<8x1024xf32> to vector<8x128xf32>
    %c4 = arith.constant 4 : index
    %40 = memref.load %arg4[%c4] : memref<8xf32, #tpu.memory_space<smem>>
    %41 = vector.broadcast %40 : f32 to vector<8x128xf32>
    %42 = arith.addf %39, %41 : vector<8x128xf32>
    %c0_34 = arith.constant 0 : index
    %c4_35 = arith.constant 4 : index
    %c0_36 = arith.constant 0 : index
    %c0_37 = arith.constant 0 : index
    %43 = vector.load %arg5[%c0_34, %c4_35, %c0_36, %c0_37] : memref<1x8x8x128xf32, #tpu.memory_space<vmem>>, vector<1x1x8x128xf32>
    %44 = vector.shape_cast %43 : vector<1x1x8x128xf32> to vector<8x128xf32>
    %45 = vector.shape_cast %42 : vector<8x128xf32> to vector<1x1x8x128xf32>
    tpu.vector_store %arg5[%c0_34, %c4_35, %c0_36, %c0_37], %45 {strides = array<i32>} : memref<1x8x8x128xf32, #tpu.memory_space<vmem>>, vector<1x1x8x128xf32>,
    %46 = vector.extract_strided_slice %10 {offsets = [0, 640], sizes = [8, 128], strides = [1, 1]} : vector<8x1024xf32> to vector<8x128xf32>
    %c5 = arith.constant 5 : index
    %47 = memref.load %arg4[%c5] : memref<8xf32, #tpu.memory_space<smem>>
    %48 = vector.broadcast %47 : f32 to vector<8x128xf32>
    %49 = arith.addf %46, %48 : vector<8x128xf32>
    %c0_38 = arith.constant 0 : index
    %c5_39 = arith.constant 5 : index
    %c0_40 = arith.constant 0 : index
    %c0_41 = arith.constant 0 : index
    %50 = vector.load %arg5[%c0_38, %c5_39, %c0_40, %c0_41] : memref<1x8x8x128xf32, #tpu.memory_space<vmem>>, vector<1x1x8x128xf32>
    %51 = vector.shape_cast %50 : vector<1x1x8x128xf32> to vector<8x128xf32>
    %52 = vector.shape_cast %49 : vector<8x128xf32> to vector<1x1x8x128xf32>
    tpu.vector_store %arg5[%c0_38, %c5_39, %c0_40, %c0_41], %52 {strides = array<i32>} : memref<1x8x8x128xf32, #tpu.memory_space<vmem>>, vector<1x1x8x128xf32>,
    %53 = vector.extract_strided_slice %10 {offsets = [0, 768], sizes = [8, 128], strides = [1, 1]} : vector<8x1024xf32> to vector<8x128xf32>
    %c6 = arith.constant 6 : index
    %54 = memref.load %arg4[%c6] : memref<8xf32, #tpu.memory_space<smem>>
    %55 = vector.broadcast %54 : f32 to vector<8x128xf32>
    %56 = arith.addf %53, %55 : vector<8x128xf32>
    %c0_42 = arith.constant 0 : index
    %c6_43 = arith.constant 6 : index
    %c0_44 = arith.constant 0 : index
    %c0_45 = arith.constant 0 : index
    %57 = vector.load %arg5[%c0_42, %c6_43, %c0_44, %c0_45] : memref<1x8x8x128xf32, #tpu.memory_space<vmem>>, vector<1x1x8x128xf32>
    %58 = vector.shape_cast %57 : vector<1x1x8x128xf32> to vector<8x128xf32>
    %59 = vector.shape_cast %56 : vector<8x128xf32> to vector<1x1x8x128xf32>
    tpu.vector_store %arg5[%c0_42, %c6_43, %c0_44, %c0_45], %59 {strides = array<i32>} : memref<1x8x8x128xf32, #tpu.memory_space<vmem>>, vector<1x1x8x128xf32>,
    %60 = vector.extract_strided_slice %10 {offsets = [0, 896], sizes = [8, 128], strides = [1, 1]} : vector<8x1024xf32> to vector<8x128xf32>
    %c7 = arith.constant 7 : index
    %61 = memref.load %arg4[%c7] : memref<8xf32, #tpu.memory_space<smem>>
    %62 = vector.broadcast %61 : f32 to vector<8x128xf32>
    %63 = arith.addf %60, %62 : vector<8x128xf32>
    %c0_46 = arith.constant 0 : index
    %c7_47 = arith.constant 7 : index
    %c0_48 = arith.constant 0 : index
    %c0_49 = arith.constant 0 : index
    %64 = vector.load %arg5[%c0_46, %c7_47, %c0_48, %c0_49] : memref<1x8x8x128xf32, #tpu.memory_space<vmem>>, vector<1x1x8x128xf32>
    %65 = vector.shape_cast %64 : vector<1x1x8x128xf32> to vector<8x128xf32>
    %66 = vector.shape_cast %63 : vector<8x128xf32> to vector<1x1x8x128xf32>
    tpu.vector_store %arg5[%c0_46, %c7_47, %c0_48, %c0_49], %66 {strides = array<i32>} : memref<1x8x8x128xf32, #tpu.memory_space<vmem>>, vector<1x1x8x128xf32>,
    return
  }
  func.func @transform_0(%arg0: i32, %arg1: i32) -> (i32, i32, i32, i32) {
    %c0_i32 = arith.constant 0 : i32
    %c0_i32_0 = arith.constant 0 : i32
    %c0_i32_1 = arith.constant 0 : i32
    return %arg0, %c0_i32, %arg1, %c0_i32_0 : i32, i32, i32, i32
  }
  func.func @transform_1(%arg0: i32, %arg1: i32) -> (i32, i32) {
    %c0_i32 = arith.constant 0 : i32
    %c0_i32_0 = arith.constant 0 : i32
    %c0_i32_1 = arith.constant 0 : i32
    return %c0_i32, %c0_i32_0 : i32, i32
  }
  func.func @transform_2(%arg0: i32, %arg1: i32) -> i32 {
    %c0_i32 = arith.constant 0 : i32
    %c0_i32_0 = arith.constant 0 : i32
    return %c0_i32 : i32
  }
  func.func @transform_3(%arg0: i32, %arg1: i32) -> (i32, i32, i32, i32) {
    %c0_i32 = arith.constant 0 : i32
    %c0_i32_0 = arith.constant 0 : i32
    %c0_i32_1 = arith.constant 0 : i32
    return %arg0, %c0_i32, %arg1, %c0_i32_0 : i32, i32, i32, i32
  }
}

</mosaic_0001>

<llo_original>
// kernel: upblock_forward.1
$region0: #{upblock_forward.1}
  #allocation0 [shape = 'u32[]', space=smem, size = 0x4, offset = 0x4, fixed_abs, tag = 'smem constant byte address 0x4 - core index']
  #allocation1 [shape = 'u32[72,128]{1,0:T(1,128)}', space=vmem, size = 0x9000, scoped, tag = 'internal scratch']
  %s0 = inlined_call_operand.vmem [shape: f32[2,4,8,32], index: 0, kind: input, shape index: {}]
  %s1 = inlined_call_operand.vmem [shape: f32[128,1024], index: 1, kind: input, shape index: {}]
  %s2 = inlined_call_operand.vmem [shape: f32[8], index: 2, kind: input, shape index: {}]
  %s3 = inlined_call_operand.vmem [shape: f32[2,8,8,128], index: 3, kind: output, shape index: {}]
  %s4 = sld [smem:[#allocation0]]
  $region49: #{upblock_forward.1} parent=0
    _
  %s6 = ssub.s32 1, %s4
  %s7 = scalar_select 0, %s6, %s4
  $region1: #{upblock_forward.1} parent=0
    #allocation2 [shape = 'u8[512]{0}', space=smem, size = 0x200, scoped, tag = 'input window, operand 2, single buffered']
    #allocation3 [shape = 's32[2]{0}', space=sflag, size = 0x8, scoped, tag = 'scoped memory for upblock_forward.1']
    %8 = vsyncpa [#allocation3], 0
    loop: start=0, step=1, limit=4
    $region2: #{upblock_forward.1} parent=1 // loop_pre_header
      _
    $region3: #{upblock_forward.1} parent=1 // loop_header
      %s10 = sphi 0, %s14
      %p11 = scmp.ge.s32.totalorder %s10, 4
      %s17 = sphi 0, %s29
      %s18 = sphi 0, %s25
      %s19 = sphi 0, %s17
      %s20 = sphi 0, %s18
      %s21 = sphi 0, %s19
      %s22 = sphi 0, %s20
      %s34 = sphi 0, %s36
      %s37 = sphi 0, %s34
      %s38 = sphi 0, %s37
      %s54 = sphi 0, %s38
      %s58 = sphi 0, %s58
      %s60 = sphi 0, %s58
      %s61 = sphi 0, %s60
      %s75 = sphi 0, %s61
      %s79 = sphi 0, %s79
      %s81 = sphi 0, %s79
      %s82 = sphi 0, %s81
      %s96 = sphi 0, %s82
      %s104 = sphi 0, %s106
      %s107 = sphi 0, %s104
      %s108 = sphi 0, %s107
      %s124 = sphi 0, %s108
    $region4: #{upblock_forward.1} parent=1 // loop_header_branch
      %13 = sbr.rel (%p11) target = $region8
    $region5: #{upblock_forward.1} parent=1 // loop_body
      %s15 = ssub.s32 %s10, 1
      %s16 = ssub.s32 %s10, 2
      %s23 = sadd.s32 1, %s18
      %p24 = scmp.ge.s32.totalorder %s23, 1
      %s25 = scalar_select %p24, 0, %s23
      %s26 = sadd.s32 1, %s17
      %s27 = scalar_select %p24, %s26, %s17
      %p28 = scmp.ge.s32.totalorder %s27, 2
      %s29 = scalar_select %p28, 0, %s27
      %s30 = ssub.s32 %s17, %s29
      %s31 = ssub.s32 %s18, %s25
      %s32 = sor.u32 %s30, %s31
      %p33 = scmp.eq.s32.totalorder %s32, 0
      %s35 = sadd.s32 %s34, 1
      %s36 = scalar_select %p33, %s34, %s35
      %p39 = pneg %p33
      %p40 = scmp.eq.s32.totalorder %s10, 1
      %p41 = por %p39, %p40
      %p42 = scmp.ne.s32.totalorder %s34, %s37
      %p43 = scmp.eq.s32.totalorder %s10, 0
      %p44 = por %p42, %p43
      %p45 = scmp.ne.s32.totalorder %s34, %s37
      %p46 = scmp.eq.s32.totalorder %s15, 1
      %p47 = por %p45, %p46
      %p48 = scmp.ne.s32.totalorder %s37, %s38
      %p49 = scmp.eq.s32.totalorder %s15, 0
      %p50 = por %p48, %p49
      %p51 = scmp.ne.s32.totalorder %s37, %s38
      %p52 = scmp.eq.s32.totalorder %s16, 1
      %p53 = por %p51, %p52
      %p55 = scmp.ne.s32.totalorder %s38, %s54
      %p56 = scmp.eq.s32.totalorder %s16, 0
      %p57 = por %p55, %p56
      %s59 = sadd.s32 %s58, 1
      %p62 = scmp.eq.s32.totalorder %s10, 1
      %p63 = scmp.ne.s32.totalorder %s58, %s60
      %p64 = scmp.eq.s32.totalorder %s10, 0
      %p65 = por %p63, %p64
      %p66 = scmp.ne.s32.totalorder %s58, %s60
      %p67 = scmp.eq.s32.totalorder %s15, 1
      %p68 = por %p66, %p67
      %p69 = scmp.ne.s32.totalorder %s60, %s61
      %p70 = scmp.eq.s32.totalorder %s15, 0
      %p71 = por %p69, %p70
      %p72 = scmp.ne.s32.totalorder %s60, %s61
      %p73 = scmp.eq.s32.totalorder %s16, 1
      %p74 = por %p72, %p73
      %p76 = scmp.ne.s32.totalorder %s61, %s75
      %p77 = scmp.eq.s32.totalorder %s16, 0
      %p78 = por %p76, %p77
      %s80 = sadd.s32 %s79, 1
      %p83 = scmp.eq.s32.totalorder %s10, 1
      %p84 = scmp.ne.s32.totalorder %s79, %s81
      %p85 = scmp.eq.s32.totalorder %s10, 0
      %p86 = por %p84, %p85
      %p87 = scmp.ne.s32.totalorder %s79, %s81
      %p88 = scmp.eq.s32.totalorder %s15, 1
      %p89 = por %p87, %p88
      %p90 = scmp.ne.s32.totalorder %s81, %s82
      %p91 = scmp.eq.s32.totalorder %s15, 0
      %p92 = por %p90, %p91
      %p93 = scmp.ne.s32.totalorder %s81, %s82
      %p94 = scmp.eq.s32.totalorder %s16, 1
      %p95 = por %p93, %p94
      %p97 = scmp.ne.s32.totalorder %s82, %s96
      %p98 = scmp.eq.s32.totalorder %s16, 0
      %p99 = por %p97, %p98
      %s100 = ssub.s32 %s17, %s29
      %s101 = ssub.s32 %s18, %s25
      %s102 = sor.u32 %s100, %s101
      %p103 = scmp.eq.s32.totalorder %s102, 0
      %s105 = sadd.s32 %s104, 1
      %s106 = scalar_select %p103, %s104, %s105
      %p109 = pneg %p103
      %p110 = scmp.eq.s32.totalorder %s10, 1
      %p111 = por %p109, %p110
      %p112 = scmp.ne.s32.totalorder %s104, %s107
      %p113 = scmp.eq.s32.totalorder %s10, 0
      %p114 = por %p112, %p113
      %p115 = scmp.ne.s32.totalorder %s104, %s107
      %p116 = scmp.eq.s32.totalorder %s15, 1
      %p117 = por %p115, %p116
      %p118 = scmp.ne.s32.totalorder %s107, %s108
      %p119 = scmp.eq.s32.totalorder %s15, 0
      %p120 = por %p118, %p119
      %p121 = scmp.ne.s32.totalorder %s107, %s108
      %p122 = scmp.eq.s32.totalorder %s16, 1
      %p123 = por %p121, %p122
      %p125 = scmp.ne.s32.totalorder %s108, %s124
      %p126 = scmp.eq.s32.totalorder %s16, 0
      %p127 = por %p125, %p126
      %p128 = scmp.le.s32.totalorder 1, %s10
      %p129 = scmp.lt.s32.totalorder %s10, 3
      %p130 = pnand %p128, %p129
      %p131 = pneg %p130
      // Predicated region
      $region9: #{upblock_forward.1} parent=5 // pred_check
        _
      $region10: #{upblock_forward.1} parent=5 // pred_check_branch
        %133 = sbr.rel (%p130) target = $region12
      $region11: #{upblock_forward.1} parent=5 // pred_region
        %s134 = ssub.s32 %s10, 1
        // Predicated region
        $region13: #{upblock_forward.1} parent=11 // pred_check
          %p135 = pneg %p71
        $region14: #{upblock_forward.1} parent=11 // pred_check_branch
          %137 = sbr.rel (%p135) target = $region16
        $region15: #{upblock_forward.1} parent=11 // pred_region
          _
        $region16: #{upblock_forward.1} parent=11 // pred_fallthru
          _
        // Predicated region
        $region17: #{upblock_forward.1} parent=11 // pred_check
          %p138 = pneg %p92
        $region18: #{upblock_forward.1} parent=11 // pred_check_branch
          %140 = sbr.rel (%p138) target = $region20
        $region19: #{upblock_forward.1} parent=11 // pred_region
          %142 = vsyncadd [#allocation3], 0
          %s144 = sshll.u32 %s2, 4
          %s145 = int_to_ptr.vmem [resolvable:$true] %s144
          %147 = dma.vmem_to_smem %s145, 16, [#allocation2], [#allocation3]
        $region20: #{upblock_forward.1} parent=11 // pred_fallthru
          _
      $region12: #{upblock_forward.1} parent=5 // pred_fallthru
        _
      %p148 = scmp.lt.s32.totalorder %s10, 2
      // Predicated region
      $region21: #{upblock_forward.1} parent=5 // pred_check
        %p149 = pneg %p148
      $region22: #{upblock_forward.1} parent=5 // pred_check_branch
        %151 = sbr.rel (%p149) target = $region24
      $region23: #{upblock_forward.1} parent=5 // pred_region
        // Predicated region
        $region25: #{upblock_forward.1} parent=23 // pred_check
          %p152 = pneg %p44
        $region26: #{upblock_forward.1} parent=23 // pred_check_branch
          %154 = sbr.rel (%p152) target = $region28
        $region27: #{upblock_forward.1} parent=23 // pred_region
          %p155 = scmp.lt.s32.totalorder %s17, 1
          %s156 = scalar_select %p155, %s17, 1
          %p157 = scmp.lt.s32.totalorder %s18, 0
          %s158 = scalar_select %p157, %s18, 0
          %s159 = smul.addr %s156, 4
          %s160 = sadd.s32 %s158, %s159
          %s161 = smul.addr %s160, 8
          %s162 = scalar_lea.vmem %s0, %s161
        $region28: #{upblock_forward.1} parent=23 // pred_fallthru
          _
      $region24: #{upblock_forward.1} parent=5 // pred_fallthru
        _
      %p163 = scmp.le.s32.totalorder 1, %s10
      %p164 = scmp.lt.s32.totalorder %s10, 3
      %p165 = pnand %p163, %p164
      %p166 = pneg %p165
      // Predicated region
      $region29: #{upblock_forward.1} parent=5 // pred_check
        _
      $region30: #{upblock_forward.1} parent=5 // pred_check_branch
        %168 = sbr.rel (%p165) target = $region32
      $region31: #{upblock_forward.1} parent=5 // pred_region
        %s169 = ssub.s32 %s10, 1
        // Predicated region
        $region33: #{upblock_forward.1} parent=31 // pred_check
          %p170 = pneg %p92
        $region34: #{upblock_forward.1} parent=31 // pred_check_branch
          %172 = sbr.rel (%p170) target = $region36
        $region35: #{upblock_forward.1} parent=31 // pred_region
          %174 = dma.done [#allocation3], 16
        $region36: #{upblock_forward.1} parent=31 // pred_fallthru
          _
        %175 = sfence
        %p176 = scmp.lt.s32.totalorder %s19, 1
        %s177 = scalar_select %p176, %s19, 1
        %p178 = scmp.lt.s32.totalorder %s20, 0
        %s179 = scalar_select %p178, %s20, 0
        %s180 = smul.addr %s177, 4
        %s181 = sadd.s32 %s179, %s180
        %s182 = smul.addr %s181, 8
        %s183 = scalar_lea.vmem %s0, %s182
        %p184 = pneg %p50
        %p185 = pneg %p47
        %p186 = pneg %p71
        %p187 = pneg %p68
        %p188 = pneg %p92
        %p189 = pneg %p89
        %p190 = pneg %p120
        %p191 = pneg %p117
        %p192 = scmp.lt.s32.totalorder %s19, 1
        %s193 = scalar_select %p192, %s19, 1
        %p194 = scmp.lt.s32.totalorder %s20, 0
        %s195 = scalar_select %p194, %s20, 0
        %s196 = smul.addr %s193, 8
        %s197 = sadd.s32 %s195, %s196
        %s198 = smul.addr %s197, 8
        %s199 = scalar_lea.vmem %s3, %s198
        %p200 = scmp.lt.s32.totalorder %s19, 1
        %s201 = scalar_select %p200, %s19, 1
        %p202 = scmp.lt.s32.totalorder %s20, 0
        %s203 = scalar_select %p202, %s20, 0
        %s204 = smul.addr %s201, 4
        %s205 = sadd.s32 %s203, %s204
        %s206 = smul.addr %s205, 8
        %s207 = scalar_lea.vmem %s0, %s206
        %p208 = scmp.lt.s32.totalorder %s19, 1
        %s209 = scalar_select %p208, %s19, 1
        %p210 = scmp.lt.s32.totalorder %s20, 0
        %s211 = scalar_select %p210, %s20, 0
        %s212 = smul.addr %s209, 8
        %s213 = sadd.s32 %s211, %s212
        %s214 = smul.addr %s213, 8
        %s215 = scalar_lea.vmem %s3, %s214
        %v216 = vld [vmem:[%s207] sm:$0xff]
        %s217 = scalar_lea.vmem %s207, 8
        %v218 = vld [vmem:[%s217] sm:$0xff]
        %s219 = scalar_lea.vmem %s207, 16
        %v220 = vld [vmem:[%s219] sm:$0xff]
        %s221 = scalar_lea.vmem %s207, 24
        %v222 = vld [vmem:[%s221] sm:$0xff]
        %224 = vrot.lane.b32.xlu0 %v218, 32
        %v225 = vpop.permute.xlu0 %224
        %228 = vrot.lane.b32.xlu0 %v220, 64
        %v229 = vpop.permute.xlu0 %228
        %232 = vrot.lane.b32.xlu0 %v222, 96
        %v233 = vpop.permute.xlu0 %232
        %vm235 = vcmask 261120
        %v236 = vsel %vm235, %v216, %v225
        %vm237 = vcmask 523264
        %v238 = vsel %vm237, %v236, %v229
        %vm239 = vcmask 785408
        %v240 = vsel %vm239, %v238, %v233
        %v241 = vld [vmem:[%s1] sm:$0xff]
        %v242 = vld [vmem:[%s1 + $0x8] sm:$0xff]
        %v243 = vld [vmem:[%s1 + $0x10] sm:$0xff]
        %v244 = vld [vmem:[%s1 + $0x18] sm:$0xff]
        %v245 = vld [vmem:[%s1 + $0x20] sm:$0xff]
        %v246 = vld [vmem:[%s1 + $0x28] sm:$0xff]
        %v247 = vld [vmem:[%s1 + $0x30] sm:$0xff]
        %v248 = vld [vmem:[%s1 + $0x38] sm:$0xff]
        %v249 = vld [vmem:[%s1 + $0x40] sm:$0xff]
        %v250 = vld [vmem:[%s1 + $0x48] sm:$0xff]
        %v251 = vld [vmem:[%s1 + $0x50] sm:$0xff]
        %v252 = vld [vmem:[%s1 + $0x58] sm:$0xff]
        %v253 = vld [vmem:[%s1 + $0x60] sm:$0xff]
        %v254 = vld [vmem:[%s1 + $0x68] sm:$0xff]
        %v255 = vld [vmem:[%s1 + $0x70] sm:$0xff]
        %v256 = vld [vmem:[%s1 + $0x78] sm:$0xff]
        %v257 = vld [vmem:[%s1 + $0x80] sm:$0xff]
        %v258 = vld [vmem:[%s1 + $0x88] sm:$0xff]
        %v259 = vld [vmem:[%s1 + $0x90] sm:$0xff]
        %v260 = vld [vmem:[%s1 + $0x98] sm:$0xff]
        %v261 = vld [vmem:[%s1 + $0xa0] sm:$0xff]
        %v262 = vld [vmem:[%s1 + $0xa8] sm:$0xff]
        %v263 = vld [vmem:[%s1 + $0xb0] sm:$0xff]
        %v264 = vld [vmem:[%s1 + $0xb8] sm:$0xff]
        %v265 = vld [vmem:[%s1 + $0xc0] sm:$0xff]
        %v266 = vld [vmem:[%s1 + $0xc8] sm:$0xff]
        %v267 = vld [vmem:[%s1 + $0xd0] sm:$0xff]
        %v268 = vld [vmem:[%s1 + $0xd8] sm:$0xff]
        %v269 = vld [vmem:[%s1 + $0xe0] sm:$0xff]
        %v270 = vld [vmem:[%s1 + $0xe8] sm:$0xff]
        %v271 = vld [vmem:[%s1 + $0xf0] sm:$0xff]
        %v272 = vld [vmem:[%s1 + $0xf8] sm:$0xff]
        %v273 = vld [vmem:[%s1 + $0x100] sm:$0xff]
        %v274 = vld [vmem:[%s1 + $0x108] sm:$0xff]
        %v275 = vld [vmem:[%s1 + $0x110] sm:$0xff]
        %v276 = vld [vmem:[%s1 + $0x118] sm:$0xff]
        %v277 = vld [vmem:[%s1 + $0x120] sm:$0xff]
        %v278 = vld [vmem:[%s1 + $0x128] sm:$0xff]
        %v279 = vld [vmem:[%s1 + $0x130] sm:$0xff]
        %v280 = vld [vmem:[%s1 + $0x138] sm:$0xff]
        %v281 = vld [vmem:[%s1 + $0x140] sm:$0xff]
        %v282 = vld [vmem:[%s1 + $0x148] sm:$0xff]
        %v283 = vld [vmem:[%s1 + $0x150] sm:$0xff]
        %v284 = vld [vmem:[%s1 + $0x158] sm:$0xff]
        %v285 = vld [vmem:[%s1 + $0x160] sm:$0xff]
        %v286 = vld [vmem:[%s1 + $0x168] sm:$0xff]
        %v287 = vld [vmem:[%s1 + $0x170] sm:$0xff]
        %v288 = vld [vmem:[%s1 + $0x178] sm:$0xff]
        %v289 = vld [vmem:[%s1 + $0x180] sm:$0xff]
        %v290 = vld [vmem:[%s1 + $0x188] sm:$0xff]
        %v291 = vld [vmem:[%s1 + $0x190] sm:$0xff]
        %v292 = vld [vmem:[%s1 + $0x198] sm:$0xff]
        %v293 = vld [vmem:[%s1 + $0x1a0] sm:$0xff]
        %v294 = vld [vmem:[%s1 + $0x1a8] sm:$0xff]
        %v295 = vld [vmem:[%s1 + $0x1b0] sm:$0xff]
        %v296 = vld [vmem:[%s1 + $0x1b8] sm:$0xff]
        %v297 = vld [vmem:[%s1 + $0x1c0] sm:$0xff]
        %v298 = vld [vmem:[%s1 + $0x1c8] sm:$0xff]
        %v299 = vld [vmem:[%s1 + $0x1d0] sm:$0xff]
        %v300 = vld [vmem:[%s1 + $0x1d8] sm:$0xff]
        %v301 = vld [vmem:[%s1 + $0x1e0] sm:$0xff]
        %v302 = vld [vmem:[%s1 + $0x1e8] sm:$0xff]
        %v303 = vld [vmem:[%s1 + $0x1f0] sm:$0xff]
        %v304 = vld [vmem:[%s1 + $0x1f8] sm:$0xff]
        %v305 = vld [vmem:[%s1 + $0x200] sm:$0xff]
        %v306 = vld [vmem:[%s1 + $0x208] sm:$0xff]
        %v307 = vld [vmem:[%s1 + $0x210] sm:$0xff]
        %v308 = vld [vmem:[%s1 + $0x218] sm:$0xff]
        %v309 = vld [vmem:[%s1 + $0x220] sm:$0xff]
        %v310 = vld [vmem:[%s1 + $0x228] sm:$0xff]
        %v311 = vld [vmem:[%s1 + $0x230] sm:$0xff]
        %v312 = vld [vmem:[%s1 + $0x238] sm:$0xff]
        %v313 = vld [vmem:[%s1 + $0x240] sm:$0xff]
        %v314 = vld [vmem:[%s1 + $0x248] sm:$0xff]
        %v315 = vld [vmem:[%s1 + $0x250] sm:$0xff]
        %v316 = vld [vmem:[%s1 + $0x258] sm:$0xff]
        %v317 = vld [vmem:[%s1 + $0x260] sm:$0xff]
        %v318 = vld [vmem:[%s1 + $0x268] sm:$0xff]
        %v319 = vld [vmem:[%s1 + $0x270] sm:$0xff]
        %v320 = vld [vmem:[%s1 + $0x278] sm:$0xff]
        %v321 = vld [vmem:[%s1 + $0x280] sm:$0xff]
        %v322 = vld [vmem:[%s1 + $0x288] sm:$0xff]
        %v323 = vld [vmem:[%s1 + $0x290] sm:$0xff]
        %v324 = vld [vmem:[%s1 + $0x298] sm:$0xff]
        %v325 = vld [vmem:[%s1 + $0x2a0] sm:$0xff]
        %v326 = vld [vmem:[%s1 + $0x2a8] sm:$0xff]
        %v327 = vld [vmem:[%s1 + $0x2b0] sm:$0xff]
        %v328 = vld [vmem:[%s1 + $0x2b8] sm:$0xff]
        %v329 = vld [vmem:[%s1 + $0x2c0] sm:$0xff]
        %v330 = vld [vmem:[%s1 + $0x2c8] sm:$0xff]
        %v331 = vld [vmem:[%s1 + $0x2d0] sm:$0xff]
        %v332 = vld [vmem:[%s1 + $0x2d8] sm:$0xff]
        %v333 = vld [vmem:[%s1 + $0x2e0] sm:$0xff]
        %v334 = vld [vmem:[%s1 + $0x2e8] sm:$0xff]
        %v335 = vld [vmem:[%s1 + $0x2f0] sm:$0xff]
        %v336 = vld [vmem:[%s1 + $0x2f8] sm:$0xff]
        %v337 = vld [vmem:[%s1 + $0x300] sm:$0xff]
        %v338 = vld [vmem:[%s1 + $0x308] sm:$0xff]
        %v339 = vld [vmem:[%s1 + $0x310] sm:$0xff]
        %v340 = vld [vmem:[%s1 + $0x318] sm:$0xff]
        %v341 = vld [vmem:[%s1 + $0x320] sm:$0xff]
        %v342 = vld [vmem:[%s1 + $0x328] sm:$0xff]
        %v343 = vld [vmem:[%s1 + $0x330] sm:$0xff]
        %v344 = vld [vmem:[%s1 + $0x338] sm:$0xff]
        %v345 = vld [vmem:[%s1 + $0x340] sm:$0xff]
        %v346 = vld [vmem:[%s1 + $0x348] sm:$0xff]
        %v347 = vld [vmem:[%s1 + $0x350] sm:$0xff]
        %v348 = vld [vmem:[%s1 + $0x358] sm:$0xff]
        %v349 = vld [vmem:[%s1 + $0x360] sm:$0xff]
        %v350 = vld [vmem:[%s1 + $0x368] sm:$0xff]
        %v351 = vld [vmem:[%s1 + $0x370] sm:$0xff]
        %v352 = vld [vmem:[%s1 + $0x378] sm:$0xff]
        %v353 = vld [vmem:[%s1 + $0x380] sm:$0xff]
        %v354 = vld [vmem:[%s1 + $0x388] sm:$0xff]
        %v355 = vld [vmem:[%s1 + $0x390] sm:$0xff]
        %v356 = vld [vmem:[%s1 + $0x398] sm:$0xff]
        %v357 = vld [vmem:[%s1 + $0x3a0] sm:$0xff]
        %v358 = vld [vmem:[%s1 + $0x3a8] sm:$0xff]
        %v359 = vld [vmem:[%s1 + $0x3b0] sm:$0xff]
        %v360 = vld [vmem:[%s1 + $0x3b8] sm:$0xff]
        %v361 = vld [vmem:[%s1 + $0x3c0] sm:$0xff]
        %v362 = vld [vmem:[%s1 + $0x3c8] sm:$0xff]
        %v363 = vld [vmem:[%s1 + $0x3d0] sm:$0xff]
        %v364 = vld [vmem:[%s1 + $0x3d8] sm:$0xff]
        %v365 = vld [vmem:[%s1 + $0x3e0] sm:$0xff]
        %v366 = vld [vmem:[%s1 + $0x3e8] sm:$0xff]
        %v367 = vld [vmem:[%s1 + $0x3f0] sm:$0xff]
        %v368 = vld [vmem:[%s1 + $0x3f8] sm:$0xff]
        %369 = vmatpush.msra.mxu0 %v361
        %370 = vmatpush.msra.mxu0 %v353
        %371 = vmatpush.msra.mxu0 %v345
        %372 = vmatpush.msra.mxu0 %v337
        %373 = vmatpush.msra.mxu0 %v329
        %374 = vmatpush.msra.mxu0 %v321
        %375 = vmatpush.msra.mxu0 %v313
        %376 = vmatpush.msra.mxu0 %v305
        %377 = vmatpush.msra.mxu0 %v297
        %378 = vmatpush.msra.mxu0 %v289
        %379 = vmatpush.msra.mxu0 %v281
        %380 = vmatpush.msra.mxu0 %v273
        %381 = vmatpush.msra.mxu0 %v265
        %382 = vmatpush.msra.mxu0 %v257
        %383 = vmatpush.msra.mxu0 %v249
        %384 = vmatpush.msra.mxu0 %v241
        %385 = vmatmul.f32.gmra.mxu0 %v240
        %v386 = vpop.f32.mrf.mxu0
        %v387 = vadd.f32 0.0, %v386
        %388 = vdwg.mxu0
        %389 = vmatpush.msra.mxu0 %v362
        %390 = vmatpush.msra.mxu0 %v354
        %391 = vmatpush.msra.mxu0 %v346
        %392 = vmatpush.msra.mxu0 %v338
        %393 = vmatpush.msra.mxu0 %v330
        %394 = vmatpush.msra.mxu0 %v322
        %395 = vmatpush.msra.mxu0 %v314
        %396 = vmatpush.msra.mxu0 %v306
        %397 = vmatpush.msra.mxu0 %v298
        %398 = vmatpush.msra.mxu0 %v290
        %399 = vmatpush.msra.mxu0 %v282
        %400 = vmatpush.msra.mxu0 %v274
        %401 = vmatpush.msra.mxu0 %v266
        %402 = vmatpush.msra.mxu0 %v258
        %403 = vmatpush.msra.mxu0 %v250
        %404 = vmatpush.msra.mxu0 %v242
        %405 = vmatmul.f32.gmra.mxu0 %v240
        %v406 = vpop.f32.mrf.mxu0
        %v407 = vadd.f32 0.0, %v406
        %408 = vdwg.mxu0
        %409 = vmatpush.msra.mxu0 %v363
        %410 = vmatpush.msra.mxu0 %v355
        %411 = vmatpush.msra.mxu0 %v347
        %412 = vmatpush.msra.mxu0 %v339
        %413 = vmatpush.msra.mxu0 %v331
        %414 = vmatpush.msra.mxu0 %v323
        %415 = vmatpush.msra.mxu0 %v315
        %416 = vmatpush.msra.mxu0 %v307
        %417 = vmatpush.msra.mxu0 %v299
        %418 = vmatpush.msra.mxu0 %v291
        %419 = vmatpush.msra.mxu0 %v283
        %420 = vmatpush.msra.mxu0 %v275
        %421 = vmatpush.msra.mxu0 %v267
        %422 = vmatpush.msra.mxu0 %v259
        %423 = vmatpush.msra.mxu0 %v251
        %424 = vmatpush.msra.mxu0 %v243
        %425 = vmatmul.f32.gmra.mxu0 %v240
        %v426 = vpop.f32.mrf.mxu0
        %v427 = vadd.f32 0.0, %v426
        %428 = vdwg.mxu0
        %429 = vmatpush.msra.mxu0 %v364
        %430 = vmatpush.msra.mxu0 %v356
        %431 = vmatpush.msra.mxu0 %v348
        %432 = vmatpush.msra.mxu0 %v340
        %433 = vmatpush.msra.mxu0 %v332
        %434 = vmatpush.msra.mxu0 %v324
        %435 = vmatpush.msra.mxu0 %v316
        %436 = vmatpush.msra.mxu0 %v308
        %437 = vmatpush.msra.mxu0 %v300
        %438 = vmatpush.msra.mxu0 %v292
        %439 = vmatpush.msra.mxu0 %v284
        %440 = vmatpush.msra.mxu0 %v276
        %441 = vmatpush.msra.mxu0 %v268
        %442 = vmatpush.msra.mxu0 %v260
        %443 = vmatpush.msra.mxu0 %v252
        %444 = vmatpush.msra.mxu0 %v244
        %445 = vmatmul.f32.gmra.mxu0 %v240
        %v446 = vpop.f32.mrf.mxu0
        %v447 = vadd.f32 0.0, %v446
        %448 = vdwg.mxu0
        %449 = vmatpush.msra.mxu0 %v365
        %450 = vmatpush.msra.mxu0 %v357
        %451 = vmatpush.msra.mxu0 %v349
        %452 = vmatpush.msra.mxu0 %v341
        %453 = vmatpush.msra.mxu0 %v333
        %454 = vmatpush.msra.mxu0 %v325
        %455 = vmatpush.msra.mxu0 %v317
        %456 = vmatpush.msra.mxu0 %v309
        %457 = vmatpush.msra.mxu0 %v301
        %458 = vmatpush.msra.mxu0 %v293
        %459 = vmatpush.msra.mxu0 %v285
        %460 = vmatpush.msra.mxu0 %v277
        %461 = vmatpush.msra.mxu0 %v269
        %462 = vmatpush.msra.mxu0 %v261
        %463 = vmatpush.msra.mxu0 %v253
        %464 = vmatpush.msra.mxu0 %v245
        %465 = vmatmul.f32.gmra.mxu0 %v240
        %v466 = vpop.f32.mrf.mxu0
        %v467 = vadd.f32 0.0, %v466
        %468 = vdwg.mxu0
        %469 = vmatpush.msra.mxu0 %v366
        %470 = vmatpush.msra.mxu0 %v358
        %471 = vmatpush.msra.mxu0 %v350
        %472 = vmatpush.msra.mxu0 %v342
        %473 = vmatpush.msra.mxu0 %v334
        %474 = vmatpush.msra.mxu0 %v326
        %475 = vmatpush.msra.mxu0 %v318
        %476 = vmatpush.msra.mxu0 %v310
        %477 = vmatpush.msra.mxu0 %v302
        %478 = vmatpush.msra.mxu0 %v294
        %479 = vmatpush.msra.mxu0 %v286
        %480 = vmatpush.msra.mxu0 %v278
        %481 = vmatpush.msra.mxu0 %v270
        %482 = vmatpush.msra.mxu0 %v262
        %483 = vmatpush.msra.mxu0 %v254
        %484 = vmatpush.msra.mxu0 %v246
        %485 = vmatmul.f32.gmra.mxu0 %v240
        %v486 = vpop.f32.mrf.mxu0
        %v487 = vadd.f32 0.0, %v486
        %488 = vdwg.mxu0
        %489 = vmatpush.msra.mxu0 %v367
        %490 = vmatpush.msra.mxu0 %v359
        %491 = vmatpush.msra.mxu0 %v351
        %492 = vmatpush.msra.mxu0 %v343
        %493 = vmatpush.msra.mxu0 %v335
        %494 = vmatpush.msra.mxu0 %v327
        %495 = vmatpush.msra.mxu0 %v319
        %496 = vmatpush.msra.mxu0 %v311
        %497 = vmatpush.msra.mxu0 %v303
        %498 = vmatpush.msra.mxu0 %v295
        %499 = vmatpush.msra.mxu0 %v287
        %500 = vmatpush.msra.mxu0 %v279
        %501 = vmatpush.msra.mxu0 %v271
        %502 = vmatpush.msra.mxu0 %v263
        %503 = vmatpush.msra.mxu0 %v255
        %504 = vmatpush.msra.mxu0 %v247
        %505 = vmatmul.f32.gmra.mxu0 %v240
        %v506 = vpop.f32.mrf.mxu0
        %v507 = vadd.f32 0.0, %v506
        %508 = vdwg.mxu0
        %509 = vmatpush.msra.mxu0 %v368
        %510 = vmatpush.msra.mxu0 %v360
        %511 = vmatpush.msra.mxu0 %v352
        %512 = vmatpush.msra.mxu0 %v344
        %513 = vmatpush.msra.mxu0 %v336
        %514 = vmatpush.msra.mxu0 %v328
        %515 = vmatpush.msra.mxu0 %v320
        %516 = vmatpush.msra.mxu0 %v312
        %517 = vmatpush.msra.mxu0 %v304
        %518 = vmatpush.msra.mxu0 %v296
        %519 = vmatpush.msra.mxu0 %v288
        %520 = vmatpush.msra.mxu0 %v280
        %521 = vmatpush.msra.mxu0 %v272
        %522 = vmatpush.msra.mxu0 %v264
        %523 = vmatpush.msra.mxu0 %v256
        %524 = vmatpush.msra.mxu0 %v248
        %525 = vmatmul.f32.gmra.mxu0 %v240
        %v526 = vpop.f32.mrf.mxu0
        %v527 = vadd.f32 0.0, %v526
        %528 = vdwg.mxu0
        %s529 = sld [smem:[#allocation2]]
        %v530 = vstv %s529
        %v531 = vadd.f32 %v387, %v530
        %532 = vst [vmem:[%s215] sm:$0xff] %v531
        %s533 = sld [smem:[#allocation2 + $0x1]]
        %v534 = vstv %s533
        %v535 = vadd.f32 %v407, %v534
        %s536 = scalar_lea.vmem %s215, 8
        %537 = vst [vmem:[%s536] sm:$0xff] %v535
        %s538 = sld [smem:[#allocation2 + $0x2]]
        %v539 = vstv %s538
        %v540 = vadd.f32 %v427, %v539
        %s541 = scalar_lea.vmem %s215, 16
        %542 = vst [vmem:[%s541] sm:$0xff] %v540
        %s543 = sld [smem:[#allocation2 + $0x3]]
        %v544 = vstv %s543
        %v545 = vadd.f32 %v447, %v544
        %s546 = scalar_lea.vmem %s215, 24
        %547 = vst [vmem:[%s546] sm:$0xff] %v545
        %s548 = sld [smem:[#allocation2 + $0x4]]
        %v549 = vstv %s548
        %v550 = vadd.f32 %v467, %v549
        %s551 = scalar_lea.vmem %s215, 32
        %552 = vst [vmem:[%s551] sm:$0xff] %v550
        %s553 = sld [smem:[#allocation2 + $0x5]]
        %v554 = vstv %s553
        %v555 = vadd.f32 %v487, %v554
        %s556 = scalar_lea.vmem %s215, 40
        %557 = vst [vmem:[%s556] sm:$0xff] %v555
        %s558 = sld [smem:[#allocation2 + $0x6]]
        %v559 = vstv %s558
        %v560 = vadd.f32 %v507, %v559
        %s561 = scalar_lea.vmem %s215, 48
        %562 = vst [vmem:[%s561] sm:$0xff] %v560
        %s563 = sld [smem:[#allocation2 + $0x7]]
        %v564 = vstv %s563
        %v565 = vadd.f32 %v527, %v564
        %s566 = scalar_lea.vmem %s215, 56
        %567 = vst [vmem:[%s566] sm:$0xff] %v565
        %p568 = scmp.lt.s32.totalorder %s19, 1
        %s569 = scalar_select %p568, %s19, 1
        %p570 = scmp.lt.s32.totalorder %s20, 0
        %s571 = scalar_select %p570, %s20, 0
        %s572 = smul.addr %s569, 8
        %s573 = sadd.s32 %s571, %s572
        %s574 = smul.addr %s573, 8
        %s575 = scalar_lea.vmem %s3, %s574
        // Predicated region
        $region37: #{upblock_forward.1} parent=31 // pred_check
          %p576 = pneg %p117
        $region38: #{upblock_forward.1} parent=31 // pred_check_branch
          %578 = sbr.rel (%p576) target = $region40
        $region39: #{upblock_forward.1} parent=31 // pred_region
          _
        $region40: #{upblock_forward.1} parent=31 // pred_fallthru
          _
      $region32: #{upblock_forward.1} parent=5 // pred_fallthru
        _
      %p579 = scmp.le.s32.totalorder 2, %s10
      // Predicated region
      $region41: #{upblock_forward.1} parent=5 // pred_check
        %p580 = pneg %p579
      $region42: #{upblock_forward.1} parent=5 // pred_check_branch
        %582 = sbr.rel (%p580) target = $region44
      $region43: #{upblock_forward.1} parent=5 // pred_region
        %s583 = ssub.s32 %s10, 2
        // Predicated region
        $region45: #{upblock_forward.1} parent=43 // pred_check
          %p584 = pneg %p123
        $region46: #{upblock_forward.1} parent=43 // pred_check_branch
          %586 = sbr.rel (%p584) target = $region48
        $region47: #{upblock_forward.1} parent=43 // pred_region
          %p587 = scmp.lt.s32.totalorder %s21, 1
          %s588 = scalar_select %p587, %s21, 1
          %p589 = scmp.lt.s32.totalorder %s22, 0
          %s590 = scalar_select %p589, %s22, 0
          %s591 = smul.addr %s588, 8
          %s592 = sadd.s32 %s590, %s591
          %s593 = smul.addr %s592, 8
          %s594 = scalar_lea.vmem %s3, %s593
        $region48: #{upblock_forward.1} parent=43 // pred_fallthru
          _
      $region44: #{upblock_forward.1} parent=5 // pred_fallthru
        _
    $region6: #{upblock_forward.1} parent=1 // loop_footer
      %s14 = sadd.s32 1, %s10
    $region7: #{upblock_forward.1} parent=1 // loop_footer_branch
      %9 = sbr.rel target = $region3
    $region8: #{upblock_forward.1} parent=1 // loop_exit
      _
    %595 = vsyncpa [#allocation3], 1
    %s596 = scalar_lea.sflag [#allocation3], 1
    %597 = vsyncpa %s596, 1

</llo_original>
